<compile_context>
chip_gen: v5e
topology: v5e:2x2
jax: 0.10.0
libtpu: 0.0.40
codegen_flags: <defaults>
</compile_context>

<pallas_src>
import functools
import math

import jax
import jax.numpy as jnp
from jax import lax
from jax.experimental import pallas as pl
from jax.experimental.pallas import tpu as pltpu


def _round_up(x: int, m: int) -> int:
    return (x + m - 1) // m * m


def _vmem_capacity_bytes() -> int:
    """Per-TensorCore VMEM capacity; conservative 64 MiB fallback (v7x per-TC)."""
    try:
        return int(pltpu.get_tpu_info().vmem_capacity_bytes)
    except Exception:
        return 64 << 20


def _largest_128_divisor_leq(total: int, cap: int) -> int:
    """Largest multiple of 128 dividing `total` that is <= max(cap, 128)."""
    cap = max(cap, 128)
    best = 128
    for c in range(128, total + 1, 128):
        if total % c == 0 and c <= cap:
            best = c
    return best


def _gelu(h, approximate: bool):
    if approximate:
        # tanh approximation -> EUP slot, essentially free next to MXU work.
        return jax.nn.gelu(h, approximate=True)
    # exact erf GELU (torch.nn.GELU() default)
    return 0.5 * h * (1.0 + lax.erf(h * (1.0 / math.sqrt(2.0))))


def _mlp_kernel_resident(x_ref, w1_ref, b1_ref, w2_ref, b2_ref, o_ref, *,
                         approximate_gelu: bool):
    # Weights have constant block indices -> stay resident in VMEM across the
    # whole 1-D row grid; no accumulator scratch needed, write output directly.
    h = jnp.dot(x_ref[...], w1_ref[...], preferred_element_type=jnp.float32)
    h = _gelu(h + b1_ref[...], approximate_gelu)
    y = jnp.dot(h.astype(w2_ref.dtype), w2_ref[...],
                preferred_element_type=jnp.float32)
    o_ref[...] = (y + b2_ref[...]).astype(o_ref.dtype)
    # TODO(synk): dropout with drop > 0.0 (training mode) would need
    # pltpu.prng_seed + pltpu.prng_random_bits; drop=0.0 here -> identity.


def _mlp_kernel_streamed(x_ref, w1_ref, b1_ref, w2_ref, b2_ref, o_ref, acc_ref,
                         *, approximate_gelu: bool):
    # grid = (row_tiles, hidden_chunks); the hidden axis is the reduction axis.
    k = pl.program_id(1)

    @pl.when(k == 0)
    def _():
        acc_ref[...] = jnp.zeros_like(acc_ref)

    h = jnp.dot(x_ref[...], w1_ref[...], preferred_element_type=jnp.float32)
    h = _gelu(h + b1_ref[...], approximate_gelu)
    acc_ref[...] += jnp.dot(h.astype(w2_ref.dtype), w2_ref[...],
                            preferred_element_type=jnp.float32)

    @pl.when(k == pl.num_programs(1) - 1)
    def _():
        o_ref[...] = (acc_ref[...] + b2_ref[...]).astype(o_ref.dtype)


def prepare_mlp_params(w1, b1, w2, b2, compute_dtype=jnp.bfloat16):
    """Pad weights to lane-dense (multiple-of-128) shapes and cast ONCE.

    Call this once and pass the result as `prepared=` to mlp_forward so the
    per-call HBM read+write of the weights (pad + cast) is hoisted out of the
    hot path (it can rival the kernel's own DMA traffic at small M).
    """
    dim, hidden = w1.shape
    out_dim = w2.shape[1]
    dim_p = _round_up(dim, 128)
    hid_p = _round_up(hidden, 128)
    out_p = _round_up(out_dim, 128)

    if (dim_p, hid_p) != tuple(w1.shape):
        w1 = jnp.pad(w1, ((0, dim_p - dim), (0, hid_p - hidden)))
    if (hid_p, out_p) != tuple(w2.shape):
        w2 = jnp.pad(w2, ((0, hid_p - hidden), (0, out_p - out_dim)))
    if b1.shape[0] != hid_p:
        b1 = jnp.pad(b1, (0, hid_p - hidden))
    if b2.shape[0] != out_p:
        b2 = jnp.pad(b2, (0, out_p - out_dim))

    return dict(
        w1=w1.astype(compute_dtype),
        b1=b1.reshape(1, hid_p).astype(jnp.float32),
        w2=w2.astype(compute_dtype),
        b2=b2.reshape(1, out_p).astype(jnp.float32),
        dim=dim, hidden=hidden, out_dim=out_dim,
        dim_p=dim_p, hid_p=hid_p, out_p=out_p,
        compute_dtype=jnp.dtype(compute_dtype),
    )


def mlp_forward(x, w1=None, b1=None, w2=None, b2=None, *, prepared=None,
                tm=1024, hk=512, compute_dtype=jnp.bfloat16,
                approximate_gelu=True, vmem_limit_bytes=None):
    """x: (B, N, dim) -> (B, N, out_dim).

    approximate_gelu=True (default) is the fast tanh/EUP path; pass False for
    torch.nn.GELU()'s exact erf.  Pass `prepared=prepare_mlp_params(...)` to
    reuse padded/cast weights across calls.
    """
    if prepared is None:
        prepared = prepare_mlp_params(w1, b1, w2, b2, compute_dtype)
    p = prepared
    cdt = p["compute_dtype"]
    itemsize = cdt.itemsize
    dim, out_dim = p["dim"], p["out_dim"]
    dim_p, hid_p, out_p = p["dim_p"], p["hid_p"], p["out_p"]

    B, N, xd = x.shape
    assert xd == dim, f"x last dim {xd} != weight dim {dim}"
    M = B * N
    out_dtype = x.dtype
    out_itemsize = jnp.dtype(out_dtype).itemsize

    # Per-TensorCore VMEM budget (also used as the scoped vmem limit).
    if vmem_limit_bytes is None:
        budget = min(int(_vmem_capacity_bytes() * 0.75), 96 << 20)
    else:
        budget = int(vmem_limit_bytes)

    # Row tile: multiple of 16 (bf16 sublane packing) / 8 (f32); prefer a
    # multiple of 256 for the 256x256 MXU when the problem is big enough.
    sub = 16 if itemsize < 4 else 8
    M_sub = _round_up(M, sub)
    tm_eff = max(sub, min(_round_up(tm, sub), M_sub))
    if tm_eff > 256:
        tm_eff = max(256, (tm_eff // 256) * 256)

    # VMEM accounting (the auto-pipeline double-buffers every changing block;
    # conservatively assume 2 buffers for the constant-index weights too).
    def _bytes_resident(tm_):
        return (2 * (dim_p * hid_p + hid_p * out_p) * itemsize   # w1, w2
                + 2 * (hid_p + out_p) * 4                        # b1, b2
                + 2 * tm_ * dim_p * itemsize                     # x tiles
                + 2 * tm_ * out_p * out_itemsize)                # out tiles

    def _bytes_streamed(tm_, hk_):
        return (2 * tm_ * dim_p * itemsize
                + 2 * (dim_p * hk_ + hk_ * out_p) * itemsize
                + 2 * (hk_ + out_p) * 4
                + 2 * tm_ * out_p * out_itemsize
                + tm_ * out_p * 4)                               # f32 acc scratch

    # Prefer weights-resident: weights are DMA'd once for the whole call.
    resident = False
    tm_try = tm_eff
    while True:
        if _bytes_resident(tm_try) <= budget:
            resident, tm_eff = True, tm_try
            break
        if tm_try <= 256:
            break
        tm_try = max(256, (tm_try // 2 // sub) * sub)

    hk_eff = hid_p
    if not resident:
        # Streamed fallback: largest multiple-of-128 divisor of hid_p <= hk,
        # shrunk further (then tm) until the per-step footprint fits.
        hk_eff = _largest_128_divisor_leq(hid_p, hk)
        while _bytes_streamed(tm_eff, hk_eff) > budget and hk_eff > 128:
            hk_eff = _largest_128_divisor_leq(hid_p, hk_eff - 128)
        while _bytes_streamed(tm_eff, hk_eff) > budget and tm_eff > sub:
            tm_eff = max(sub, (tm_eff // 2 // sub) * sub)

    M_p = _round_up(M, tm_eff)
    n_row = M_p // tm_eff

    # Activations: pad only when actually needed, then cast to compute dtype.
    x2d = x.reshape(M, dim)
    if M_p != M or dim_p != dim:
        x2d = jnp.pad(x2d, ((0, M_p - M), (0, dim_p - dim)))
    x2d = x2d.astype(cdt)

    weight_reads = 1 if resident else n_row
    cost = pl.CostEstimate(
        flops=2 * M_p * dim_p * hid_p + 2 * M_p * hid_p * out_p,
        transcendentals=M_p * hid_p,
        bytes_accessed=(M_p * dim_p * itemsize
                        + weight_reads * (dim_p * hid_p + hid_p * out_p) * itemsize
                        + weight_reads * (hid_p + out_p) * 4
                        + M_p * out_p * out_itemsize),
    )

    if resident:
        kernel = functools.partial(_mlp_kernel_resident,
                                   approximate_gelu=approximate_gelu)
        grid_spec = pltpu.PrefetchScalarGridSpec(
            num_scalar_prefetch=0,
            grid=(n_row,),
            in_specs=[
                pl.BlockSpec((tm_eff, dim_p), lambda i: (i, 0)),   # x rows
                pl.BlockSpec((dim_p, hid_p), lambda i: (0, 0)),    # w1 (resident)
                pl.BlockSpec((1, hid_p), lambda i: (0, 0)),        # b1 (resident)
                pl.BlockSpec((hid_p, out_p), lambda i: (0, 0)),    # w2 (resident)
                pl.BlockSpec((1, out_p), lambda i: (0, 0)),        # b2 (resident)
            ],
            out_specs=pl.BlockSpec((tm_eff, out_p), lambda i: (i, 0)),
        )
        dim_sem = ("parallel",)
    else:
        kernel = functools.partial(_mlp_kernel_streamed,
                                   approximate_gelu=approximate_gelu)
        grid_spec = pltpu.PrefetchScalarGridSpec(
            num_scalar_prefetch=0,
            grid=(n_row, hid_p // hk_eff),
            in_specs=[
                pl.BlockSpec((tm_eff, dim_p), lambda i, k: (i, 0)),  # x rows
                pl.BlockSpec((dim_p, hk_eff), lambda i, k: (0, k)),  # w1 chunk
                pl.BlockSpec((1, hk_eff), lambda i, k: (0, k)),      # b1 chunk
                pl.BlockSpec((hk_eff, out_p), lambda i, k: (k, 0)),  # w2 chunk
                pl.BlockSpec((1, out_p), lambda i, k: (0, 0)),       # b2
            ],
            out_specs=pl.BlockSpec((tm_eff, out_p), lambda i, k: (i, 0)),
            scratch_shapes=[pltpu.VMEM((tm_eff, out_p), jnp.float32)],
        )
        dim_sem = ("parallel", "arbitrary")

    out2d = pl.pallas_call(
        kernel,
        out_shape=jax.ShapeDtypeStruct((M_p, out_p), out_dtype),
        grid_spec=grid_spec,
        compiler_params=pltpu.CompilerParams(
            dimension_semantics=dim_sem,
            vmem_limit_bytes=budget,
        ),
        cost_estimate=cost,
    )(x2d, p["w1"], p["b1"], p["w2"], p["b2"])

    return out2d[:M, :out_dim].reshape(B, N, out_dim)


def _ref_mlp(x, w1, b1, w2, b2):
    h = jnp.einsum("bnd,dh->bnh", x, w1, precision=lax.Precision.HIGHEST) + b1
    h = 0.5 * h * (1.0 + lax.erf(h * (1.0 / math.sqrt(2.0))))
    return jnp.einsum("bnh,ho->bno", h, w2, precision=lax.Precision.HIGHEST) + b2


if __name__ == "__main__":
    # Small shapes consistent with MLP(dim, hidden_dim) applied to tokens.
    B, N, dim, hidden = 2, 8, 16, 32
    out_dim = dim  # out_dim defaults to dim in the module

    key = jax.random.PRNGKey(0)
    kx, kw1, kb1, kw2, kb2 = jax.random.split(key, 5)

    x = jax.random.normal(kx, (B, N, dim), dtype=jnp.float32)
    # Deterministic synthetic parameters (shapes per nn.Linear in __init__).
    w1 = jax.random.normal(kw1, (dim, hidden), dtype=jnp.float32) * 0.05
    b1 = jax.random.normal(kb1, (hidden,), dtype=jnp.float32) * 0.05
    w2 = jax.random.normal(kw2, (hidden, out_dim), dtype=jnp.float32) * 0.05
    b2 = jax.random.normal(kb2, (out_dim,), dtype=jnp.float32) * 0.05

    y_ref = _ref_mlp(x, w1, b1, w2, b2)

    # Fast path: bf16 MXU inputs + f32 accumulation, tanh-GELU (EUP slot),
    # weights pre-padded/cast once and reused (weights-resident mode).
    prep = prepare_mlp_params(w1, b1, w2, b2)
    y_fast = mlp_forward(x, prepared=prep)
    jax.block_until_ready(y_fast)
    assert y_fast.shape == (B, N, out_dim)
    assert jnp.allclose(y_fast, y_ref, atol=2e-2, rtol=2e-2), \
        "bf16/tanh fast path mismatch vs reference"

    # Tight math check: f32 compute, exact erf GELU (torch nn.GELU default).
    y_exact = mlp_forward(x, w1, b1, w2, b2, compute_dtype=jnp.float32,
                          approximate_gelu=False)
    jax.block_until_ready(y_exact)
    assert jnp.allclose(y_exact, y_ref, atol=1e-4, rtol=1e-4), \
        "f32/erf path mismatch vs reference"

    print("KERNEL_OK")
</pallas_src>

<mosaic_0001>
module attributes {stable_mosaic.version = 11 : i64} {
  func.func @_mlp_kernel_resident(%arg0: i32, %arg1: memref<16x128xbf16, #tpu.memory_space<vmem>>, %arg2: memref<128x128xbf16, #tpu.memory_space<vmem>>, %arg3: memref<1x128xf32, #tpu.memory_space<vmem>>, %arg4: memref<128x128xbf16, #tpu.memory_space<vmem>>, %arg5: memref<1x128xf32, #tpu.memory_space<vmem>>, %arg6: memref<16x128xf32, #tpu.memory_space<vmem>>) attributes {dimension_semantics = [#tpu.dimension_semantics<parallel>], iteration_bounds = array<i64: 1>, scalar_prefetch = 0 : i64, scratch_operands = 0 : i64, tpu.core_type = #tpu.core_type<tc>, window_params = [{transform_indices = @transform_0, window_bounds = array<i64: 16, 128>}, {pipeline_mode = #tpu.pipeline_mode<synchronous>, transform_indices = @transform_1, window_bounds = array<i64: 128, 128>}, {pipeline_mode = #tpu.pipeline_mode<synchronous>, transform_indices = @transform_2, window_bounds = array<i64: 1, 128>}, {pipeline_mode = #tpu.pipeline_mode<synchronous>, transform_indices = @transform_3, window_bounds = array<i64: 128, 128>}, {pipeline_mode = #tpu.pipeline_mode<synchronous>, transform_indices = @transform_4, window_bounds = array<i64: 1, 128>}, {transform_indices = @transform_5, window_bounds = array<i64: 16, 128>}]} {
    %c0 = arith.constant 0 : index
    %c0_0 = arith.constant 0 : index
    %0 = vector.load %arg1[%c0, %c0_0] : memref<16x128xbf16, #tpu.memory_space<vmem>>, vector<16x128xbf16>
    %c0_1 = arith.constant 0 : index
    %c0_2 = arith.constant 0 : index
    %1 = vector.load %arg2[%c0_1, %c0_2] : memref<128x128xbf16, #tpu.memory_space<vmem>>, vector<128x128xbf16>
    %cst = arith.constant dense<0.000000e+00> : vector<16x128xf32>
    %2 = tpu.matmul %0, %1, %cst {dimension_numbers = #tpu.dot_dimension_numbers<[1], [0], [0], [1], [0, 0, 1, 1], [], []>} : vector<16x128xbf16>, vector<128x128xbf16>, vector<16x128xf32> -> vector<16x128xf32>
    %c0_3 = arith.constant 0 : index
    %c0_4 = arith.constant 0 : index
    %3 = vector.load %arg3[%c0_3, %c0_4] : memref<1x128xf32, #tpu.memory_space<vmem>>, vector<1x128xf32>
    %4 = vector.broadcast %3 : vector<1x128xf32> to vector<16x128xf32>
    %5 = arith.addf %2, %4 : vector<16x128xf32>
    %6 = arith.mulf %5, %5 : vector<16x128xf32>
    %7 = arith.mulf %5, %6 : vector<16x128xf32>
    %cst_5 = arith.constant 4.471500e-02 : f32
    %8 = vector.broadcast %cst_5 : f32 to vector<16x128xf32>
    %9 = arith.mulf %8, %7 : vector<16x128xf32>
    %10 = arith.addf %5, %9 : vector<16x128xf32>
    %cst_6 = arith.constant 0.797884583 : f32
    %11 = vector.broadcast %cst_6 : f32 to vector<16x128xf32>
    %12 = arith.mulf %11, %10 : vector<16x128xf32>
    %13 = math.tanh %12 : vector<16x128xf32>
    %cst_7 = arith.constant 1.000000e+00 : f32
    %14 = vector.broadcast %cst_7 : f32 to vector<16x128xf32>
    %15 = arith.addf %14, %13 : vector<16x128xf32>
    %cst_8 = arith.constant 5.000000e-01 : f32
    %16 = vector.broadcast %cst_8 : f32 to vector<16x128xf32>
    %17 = arith.mulf %16, %15 : vector<16x128xf32>
    %18 = arith.mulf %5, %17 : vector<16x128xf32>
    %19 = arith.truncf %18 : vector<16x128xf32> to vector<16x128xbf16>
    %c0_9 = arith.constant 0 : index
    %c0_10 = arith.constant 0 : index
    %20 = vector.load %arg4[%c0_9, %c0_10] : memref<128x128xbf16, #tpu.memory_space<vmem>>, vector<128x128xbf16>
    %cst_11 = arith.constant dense<0.000000e+00> : vector<16x128xf32>
    %21 = tpu.matmul %19, %20, %cst_11 {dimension_numbers = #tpu.dot_dimension_numbers<[1], [0], [0], [1], [0, 0, 1, 1], [], []>} : vector<16x128xbf16>, vector<128x128xbf16>, vector<16x128xf32> -> vector<16x128xf32>
    %c0_12 = arith.constant 0 : index
    %c0_13 = arith.constant 0 : index
    %22 = vector.load %arg5[%c0_12, %c0_13] : memref<1x128xf32, #tpu.memory_space<vmem>>, vector<1x128xf32>
    %23 = vector.broadcast %22 : vector<1x128xf32> to vector<16x128xf32>
    %24 = arith.addf %21, %23 : vector<16x128xf32>
    %c0_14 = arith.constant 0 : index
    %c0_15 = arith.constant 0 : index
    %25 = vector.load %arg6[%c0_14, %c0_15] : memref<16x128xf32, #tpu.memory_space<vmem>>, vector<16x128xf32>
    tpu.vector_store %arg6[%c0_14, %c0_15], %24 {strides = array<i32>} : memref<16x128xf32, #tpu.memory_space<vmem>>, vector<16x128xf32>,
    return
  }
  func.func @transform_0(%arg0: i32) -> (i32, i32) {
    %c0_i32 = arith.constant 0 : i32
    %c0_i32_0 = arith.constant 0 : i32
    return %arg0, %c0_i32 : i32, i32
  }
  func.func @transform_1(%arg0: i32) -> (i32, i32) {
    %c0_i32 = arith.constant 0 : i32
    %c0_i32_0 = arith.constant 0 : i32
    %c0_i32_1 = arith.constant 0 : i32
    return %c0_i32, %c0_i32_0 : i32, i32
  }
  func.func @transform_2(%arg0: i32) -> (i32, i32) {
    %c0_i32 = arith.constant 0 : i32
    %c0_i32_0 = arith.constant 0 : i32
    %c0_i32_1 = arith.constant 0 : i32
    return %c0_i32, %c0_i32_0 : i32, i32
  }
  func.func @transform_3(%arg0: i32) -> (i32, i32) {
    %c0_i32 = arith.constant 0 : i32
    %c0_i32_0 = arith.constant 0 : i32
    %c0_i32_1 = arith.constant 0 : i32
    return %c0_i32, %c0_i32_0 : i32, i32
  }
  func.func @transform_4(%arg0: i32) -> (i32, i32) {
    %c0_i32 = arith.constant 0 : i32
    %c0_i32_0 = arith.constant 0 : i32
    %c0_i32_1 = arith.constant 0 : i32
    return %c0_i32, %c0_i32_0 : i32, i32
  }
  func.func @transform_5(%arg0: i32) -> (i32, i32) {
    %c0_i32 = arith.constant 0 : i32
    %c0_i32_0 = arith.constant 0 : i32
    return %arg0, %c0_i32 : i32, i32
  }
}

</mosaic_0001>

<llo_original>
// kernel: tpu_custom_call.1
$region0: #{tpu_custom_call.1}
  #allocation0 [shape = 'u32[]', space=smem, size = 0x4, offset = 0x4, fixed_abs, tag = 'smem constant byte address 0x4 - core index']
  #allocation1 [shape = 'u32[72,128]{1,0:T(1,128)}', space=vmem, size = 0x9000, scoped, tag = 'internal scratch']
  %s0 = inlined_call_operand.hbm [shape: bf16[16,128], index: 0, kind: input, shape index: {}]
  %s1 = inlined_call_operand.hbm [shape: bf16[128,128], index: 1, kind: input, shape index: {}]
  %s2 = inlined_call_operand.vmem [shape: f32[1,128], index: 2, kind: input, shape index: {}]
  %s3 = inlined_call_operand.hbm [shape: bf16[128,128], index: 3, kind: input, shape index: {}]
  %s4 = inlined_call_operand.vmem [shape: f32[1,128], index: 4, kind: input, shape index: {}]
  %s5 = inlined_call_operand.hbm [shape: f32[16,128], index: 5, kind: output, shape index: {}]
  %s6 = sld [smem:[#allocation0]]
  $region42: #{tpu_custom_call.1} parent=0
    _
  %s8 = ssub.s32 1, %s6
  %s9 = scalar_select 0, %s8, %s6
  $region1: #{tpu_custom_call.1} parent=0
    #allocation2 [shape = 'u8[4096]{0}', space=vmem, size = 0x1000, scoped, tag = 'input window, operand 0, single buffered']
    #allocation3 [shape = 's32[1]{0}', space=sflag, size = 0x4, scoped, tag = 'scoped memory for tpu_custom_call.1']
    #allocation4 [shape = 's32[1]{0}', space=sflag, size = 0x4, scoped, tag = 'scoped memory for tpu_custom_call.1']
    #allocation5 [shape = 'u8[32768]{0}', space=vmem, size = 0x8000, scoped, tag = 'input window, operand 1, single buffered']
    #allocation6 [shape = 's32[1]{0}', space=sflag, size = 0x4, scoped, tag = 'scoped memory for tpu_custom_call.1']
    #allocation7 [shape = 'u8[32768]{0}', space=vmem, size = 0x8000, scoped, tag = 'input window, operand 3, single buffered']
    #allocation8 [shape = 'u8[8192]{0}', space=vmem, size = 0x2000, scoped, tag = 'output window, operand 0, single buffered']
    %10 = vsyncpa [#allocation3], 0
    %11 = vsyncpa [#allocation6], 0
    %12 = vsyncpa [#allocation4], 0
    // Predicated region
    $region2: #{tpu_custom_call.1} parent=1 // pred_check
      _
    $region3: #{tpu_custom_call.1} parent=1 // pred_check_branch
      %14 = sbr.rel (0) target = $region5
    $region4: #{tpu_custom_call.1} parent=1 // pred_region
      %16 = vsyncadd [#allocation3], 0
      %s17 = sshll.u32 %s0, 4
      %s18 = int_to_ptr.hbm [resolvable:$true] %s17
      %s19 = sshll.u32 [#allocation2], 4
      %s20 = int_to_ptr.vmem [resolvable:$true] %s19
      %25 = dma.hbm_to_vmem [thread:$0]  %s18, 128, %s20, [#allocation3], 64, 64, 4
    $region5: #{tpu_custom_call.1} parent=1 // pred_fallthru
      _
    // Predicated region
    $region6: #{tpu_custom_call.1} parent=1 // pred_check
      _
    $region7: #{tpu_custom_call.1} parent=1 // pred_check_branch
      %27 = sbr.rel (0) target = $region9
    $region8: #{tpu_custom_call.1} parent=1 // pred_region
      %29 = vsyncadd [#allocation6], 0
      %s30 = sshll.u32 %s1, 4
      %s31 = int_to_ptr.hbm [resolvable:$true] %s30
      %s32 = sshll.u32 [#allocation5], 4
      %s33 = int_to_ptr.vmem [resolvable:$true] %s32
      %38 = dma.hbm_to_vmem [thread:$0]  %s31, 1024, %s33, [#allocation6], 64, 64, 4
    $region9: #{tpu_custom_call.1} parent=1 // pred_fallthru
      _
    // Predicated region
    $region10: #{tpu_custom_call.1} parent=1 // pred_check
      _
    $region11: #{tpu_custom_call.1} parent=1 // pred_check_branch
      %40 = sbr.rel (0) target = $region13
    $region12: #{tpu_custom_call.1} parent=1 // pred_region
      _
    $region13: #{tpu_custom_call.1} parent=1 // pred_fallthru
      _
    // Predicated region
    $region14: #{tpu_custom_call.1} parent=1 // pred_check
      _
    $region15: #{tpu_custom_call.1} parent=1 // pred_check_branch
      %42 = sbr.rel (0) target = $region17
    $region16: #{tpu_custom_call.1} parent=1 // pred_region
      %44 = vsyncadd [#allocation6], 0
      %s45 = sshll.u32 %s3, 4
      %s46 = int_to_ptr.hbm [resolvable:$true] %s45
      %s47 = sshll.u32 [#allocation7], 4
      %s48 = int_to_ptr.vmem [resolvable:$true] %s47
      %53 = dma.hbm_to_vmem [thread:$0]  %s46, 1024, %s48, [#allocation6], 64, 64, 4
    $region17: #{tpu_custom_call.1} parent=1 // pred_fallthru
      _
    // Predicated region
    $region18: #{tpu_custom_call.1} parent=1 // pred_check
      _
    $region19: #{tpu_custom_call.1} parent=1 // pred_check_branch
      %55 = sbr.rel (0) target = $region21
    $region20: #{tpu_custom_call.1} parent=1 // pred_region
      _
    $region21: #{tpu_custom_call.1} parent=1 // pred_fallthru
      _
    // Predicated region
    $region22: #{tpu_custom_call.1} parent=1 // pred_check
      _
    $region23: #{tpu_custom_call.1} parent=1 // pred_check_branch
      %57 = sbr.rel (0) target = $region25
    $region24: #{tpu_custom_call.1} parent=1 // pred_region
      %59 = dma.done [#allocation3], 128
    $region25: #{tpu_custom_call.1} parent=1 // pred_fallthru
      _
    // Predicated region
    $region26: #{tpu_custom_call.1} parent=1 // pred_check
      _
    $region27: #{tpu_custom_call.1} parent=1 // pred_check_branch
      %61 = sbr.rel (0) target = $region29
    $region28: #{tpu_custom_call.1} parent=1 // pred_region
      %63 = dma.done [#allocation6], 1024
    $region29: #{tpu_custom_call.1} parent=1 // pred_fallthru
      _
    // Predicated region
    $region30: #{tpu_custom_call.1} parent=1 // pred_check
      _
    $region31: #{tpu_custom_call.1} parent=1 // pred_check_branch
      %65 = sbr.rel (0) target = $region33
    $region32: #{tpu_custom_call.1} parent=1 // pred_region
      %67 = dma.done [#allocation6], 1024
    $region33: #{tpu_custom_call.1} parent=1 // pred_fallthru
      _
    %v68 = vld [vmem:[#allocation2] sm:$0xf]
    %v69 = vld [vmem:[#allocation2 + $0x4] sm:$0xf]
    %v70 = vld [vmem:[#allocation5] sm:$0xf]
    %v71 = vld [vmem:[#allocation5 + $0x4] sm:$0xf]
    %v72 = vld [vmem:[#allocation5 + $0x8] sm:$0xf]
    %v73 = vld [vmem:[#allocation5 + $0xc] sm:$0xf]
    %v74 = vld [vmem:[#allocation5 + $0x10] sm:$0xf]
    %v75 = vld [vmem:[#allocation5 + $0x14] sm:$0xf]
    %v76 = vld [vmem:[#allocation5 + $0x18] sm:$0xf]
    %v77 = vld [vmem:[#allocation5 + $0x1c] sm:$0xf]
    %v78 = vld [vmem:[#allocation5 + $0x20] sm:$0xf]
    %v79 = vld [vmem:[#allocation5 + $0x24] sm:$0xf]
    %v80 = vld [vmem:[#allocation5 + $0x28] sm:$0xf]
    %v81 = vld [vmem:[#allocation5 + $0x2c] sm:$0xf]
    %v82 = vld [vmem:[#allocation5 + $0x30] sm:$0xf]
    %v83 = vld [vmem:[#allocation5 + $0x34] sm:$0xf]
    %v84 = vld [vmem:[#allocation5 + $0x38] sm:$0xf]
    %v85 = vld [vmem:[#allocation5 + $0x3c] sm:$0xf]
    %v86 = vld [vmem:[%s2] sm:$0x1]
    %v88 = vperm.slane %v86, 0
    %v92 = vunpack.c.l.b16 %v68
    %v93 = vunpack.c.l.b16 %v69
    %v94 = vpack.c.b16 %v93, %v92
    %v112 = vunpack.c.l.b16 %v70
    %v113 = vunpack.c.l.b16 %v71
    %v114 = vunpack.c.l.b16 %v72
    %v115 = vunpack.c.l.b16 %v73
    %v116 = vunpack.c.l.b16 %v74
    %v117 = vunpack.c.l.b16 %v75
    %v118 = vunpack.c.l.b16 %v76
    %v119 = vunpack.c.l.b16 %v77
    %v120 = vunpack.c.l.b16 %v78
    %v121 = vunpack.c.l.b16 %v79
    %v122 = vunpack.c.l.b16 %v80
    %v123 = vunpack.c.l.b16 %v81
    %v124 = vunpack.c.l.b16 %v82
    %v125 = vunpack.c.l.b16 %v83
    %v126 = vunpack.c.l.b16 %v84
    %v127 = vunpack.c.l.b16 %v85
    %v128 = vpack.c.b16 %v113, %v112
    %v129 = vpack.c.b16 %v115, %v114
    %v130 = vpack.c.b16 %v117, %v116
    %v131 = vpack.c.b16 %v119, %v118
    %v132 = vpack.c.b16 %v121, %v120
    %v133 = vpack.c.b16 %v123, %v122
    %v134 = vpack.c.b16 %v125, %v124
    %v135 = vpack.c.b16 %v127, %v126
    %144 = vmatpush.bf16.msra.mxu0 %v135
    %145 = vmatpush.bf16.msra.mxu0 %v134
    %146 = vmatpush.bf16.msra.mxu0 %v133
    %147 = vmatpush.bf16.msra.mxu0 %v132
    %148 = vmatpush.bf16.msra.mxu0 %v131
    %149 = vmatpush.bf16.msra.mxu0 %v130
    %150 = vmatpush.bf16.msra.mxu0 %v129
    %151 = vmatpush.bf16.msra.mxu0 %v128
    %152 = vmatmul.bf16.gmra.mxu0 %v94
    %v153 = vpop.f32.mrf.mxu0
    %v154 = vadd.f32 %v88, %v153
    %v155 = vpop.f32.mrf.mxu0
    %v156 = vadd.f32 %v88, %v155
    %157 = vdwg.mxu0
    %v158 = vmul.f32 %v154, %v154
    %v159 = vmul.f32 %v156, %v156
    %v160 = vmul.f32 %v154, %v158
    %v161 = vmul.f32 %v156, %v159
    %v162 = vmul.f32 %v160, 0.044715
    %v163 = vmul.f32 %v161, 0.044715
    %v164 = vadd.f32 %v154, %v162
    %v165 = vadd.f32 %v156, %v163
    %v166 = vmul.f32 %v164, 0.7978846
    %v167 = vmul.f32 %v165, 0.7978846
    %v168 = vtanh.pop %v166
    %v169 = vtanh.pop %v167
    %v170 = vadd.f32 %v168, 1.0
    %v171 = vadd.f32 %v169, 1.0
    %v172 = vmul.f32 %v170, 0.5
    %v173 = vmul.f32 %v171, 0.5
    %v174 = vmul.f32 %v154, %v172
    %v175 = vmul.f32 %v156, %v173
    %v176 = vpack.c.bf16 %v175, %v174
    %v177 = vld [vmem:[#allocation7] sm:$0xf]
    %v178 = vld [vmem:[#allocation7 + $0x4] sm:$0xf]
    %v179 = vld [vmem:[#allocation7 + $0x8] sm:$0xf]
    %v180 = vld [vmem:[#allocation7 + $0xc] sm:$0xf]
    %v181 = vld [vmem:[#allocation7 + $0x10] sm:$0xf]
    %v182 = vld [vmem:[#allocation7 + $0x14] sm:$0xf]
    %v183 = vld [vmem:[#allocation7 + $0x18] sm:$0xf]
    %v184 = vld [vmem:[#allocation7 + $0x1c] sm:$0xf]
    %v185 = vld [vmem:[#allocation7 + $0x20] sm:$0xf]
    %v186 = vld [vmem:[#allocation7 + $0x24] sm:$0xf]
    %v187 = vld [vmem:[#allocation7 + $0x28] sm:$0xf]
    %v188 = vld [vmem:[#allocation7 + $0x2c] sm:$0xf]
    %v189 = vld [vmem:[#allocation7 + $0x30] sm:$0xf]
    %v190 = vld [vmem:[#allocation7 + $0x34] sm:$0xf]
    %v191 = vld [vmem:[#allocation7 + $0x38] sm:$0xf]
    %v192 = vld [vmem:[#allocation7 + $0x3c] sm:$0xf]
    %v193 = vld [vmem:[%s4] sm:$0x1]
    %v195 = vperm.slane %v193, 0
    %v213 = vunpack.c.l.b16 %v177
    %v214 = vunpack.c.l.b16 %v178
    %v215 = vunpack.c.l.b16 %v179
    %v216 = vunpack.c.l.b16 %v180
    %v217 = vunpack.c.l.b16 %v181
    %v218 = vunpack.c.l.b16 %v182
    %v219 = vunpack.c.l.b16 %v183
    %v220 = vunpack.c.l.b16 %v184
    %v221 = vunpack.c.l.b16 %v185
    %v222 = vunpack.c.l.b16 %v186
    %v223 = vunpack.c.l.b16 %v187
    %v224 = vunpack.c.l.b16 %v188
    %v225 = vunpack.c.l.b16 %v189
    %v226 = vunpack.c.l.b16 %v190
    %v227 = vunpack.c.l.b16 %v191
    %v228 = vunpack.c.l.b16 %v192
    %v229 = vpack.c.b16 %v214, %v213
    %v230 = vpack.c.b16 %v216, %v215
    %v231 = vpack.c.b16 %v218, %v217
    %v232 = vpack.c.b16 %v220, %v219
    %v233 = vpack.c.b16 %v222, %v221
    %v234 = vpack.c.b16 %v224, %v223
    %v235 = vpack.c.b16 %v226, %v225
    %v236 = vpack.c.b16 %v228, %v227
    %245 = vmatpush.bf16.msra.mxu0 %v236
    %246 = vmatpush.bf16.msra.mxu0 %v235
    %247 = vmatpush.bf16.msra.mxu0 %v234
    %248 = vmatpush.bf16.msra.mxu0 %v233
    %249 = vmatpush.bf16.msra.mxu0 %v232
    %250 = vmatpush.bf16.msra.mxu0 %v231
    %251 = vmatpush.bf16.msra.mxu0 %v230
    %252 = vmatpush.bf16.msra.mxu0 %v229
    %253 = vmatmul.bf16.gmra.mxu0 %v176
    %v254 = vpop.f32.mrf.mxu0
    %v255 = vadd.f32 %v195, %v254
    %v256 = vpop.f32.mrf.mxu0
    %v257 = vadd.f32 %v195, %v256
    %258 = vdwg.mxu0
    %259 = vst [vmem:[#allocation8] sm:$0xff] %v255
    %260 = vst [vmem:[#allocation8 + $0x8] sm:$0xff] %v257
    // Predicated region
    $region34: #{tpu_custom_call.1} parent=1 // pred_check
      _
    $region35: #{tpu_custom_call.1} parent=1 // pred_check_branch
      %262 = sbr.rel (0) target = $region37
    $region36: #{tpu_custom_call.1} parent=1 // pred_region
      %264 = vsyncadd [#allocation4], 0
      %s265 = sshll.u32 [#allocation8], 4
      %s266 = int_to_ptr.vmem [resolvable:$true] %s265
      %s267 = sshll.u32 %s5, 4
      %s268 = int_to_ptr.hbm [resolvable:$true] %s267
      %273 = dma.vmem_to_hbm [thread:$0]  %s266, 256, %s268, [#allocation4], 128, 128, 8
    $region37: #{tpu_custom_call.1} parent=1 // pred_fallthru
      _
    // Predicated region
    $region38: #{tpu_custom_call.1} parent=1 // pred_check
      _
    $region39: #{tpu_custom_call.1} parent=1 // pred_check_branch
      %275 = sbr.rel (0) target = $region41
    $region40: #{tpu_custom_call.1} parent=1 // pred_region
      %277 = dma.done [#allocation4], 256
    $region41: #{tpu_custom_call.1} parent=1 // pred_fallthru
      _
    %278 = vsyncpa [#allocation3], 1
    %279 = vsyncpa [#allocation6], 1
    %280 = vsyncpa [#allocation4], 1

</llo_original>
